<compile_context>
chip_gen: v6e
topology: v6e:2x2x1
jax: 0.10.0
libtpu: 0.0.40
codegen_flags: <defaults>
</compile_context>

<pallas_src>
import jax
import jax.numpy as jnp
from jax.experimental import pallas as pl
from jax.experimental.pallas import tpu as pltpu


def _leaky(v):
    return jnp.where(v >= 0, v, 0.01 * v)


def _resconv_identity_kernel(x_ref, w1_ref, shift_ref, w2_ref, b2_ref, o_ref):
    """Shortcut is nn.Identity (in_channels == out_channels)."""
    x = x_ref[...]
    # Conv1d(in,in,1,bias=False) with BN scale pre-folded into W1 columns.
    h = jnp.dot(x, w1_ref[...], preferred_element_type=jnp.float32)
    h = _leaky(h + shift_ref[...])
    # TODO(synk): Dropout1d(0.2) is identity in eval mode; training-mode per-(N,C)
    # channel dropout is not implemented here.
    y1 = jnp.dot(h.astype(w2_ref.dtype), w2_ref[...],
                 preferred_element_type=jnp.float32) + b2_ref[...]
    y = y1 + x.astype(jnp.float32)          # identity shortcut: plain add, no matmul
    o_ref[...] = _leaky(y).astype(o_ref.dtype)


def _resconv_proj_kernel(x_ref, w1_ref, shift_ref, w2_ref, b2_ref, ws_ref, o_ref):
    """Shortcut is Conv1d(in,out,1,bias=False)."""
    x = x_ref[...]
    h = jnp.dot(x, w1_ref[...], preferred_element_type=jnp.float32)
    h = _leaky(h + shift_ref[...])
    # TODO(synk): Dropout1d(0.2) identity (eval mode only).
    y1 = jnp.dot(h.astype(w2_ref.dtype), w2_ref[...],
                 preferred_element_type=jnp.float32) + b2_ref[...]
    y2 = jnp.dot(x, ws_ref[...], preferred_element_type=jnp.float32)
    y = y1 + y2
    o_ref[...] = _leaky(y).astype(o_ref.dtype)


def _round_up(x, m):
    return ((x + m - 1) // m) * m


def res_conv1d_1x1(x_ncl, w1, bn_gamma, bn_beta, bn_mean, bn_var, w2, b2,
                   ws=None, *, eps=1e-5, tm=512):
    """x_ncl: (N, C_in, L). Conv weights as (C_in, C_out). Returns (N, C_out, L)."""
    N, C_in, L = x_ncl.shape
    C_out = w2.shape[1]
    if ws is None and C_in != C_out:
        raise ValueError("identity shortcut requires in_channels == out_channels; "
                         "pass `ws` for a projection shortcut")
    has_proj = ws is not None
    compute_dtype = x_ncl.dtype

    # Fold eval-mode BatchNorm: scale into W1 columns, keep shift as a bias.
    scale = (bn_gamma.astype(jnp.float32) /
             jnp.sqrt(bn_var.astype(jnp.float32) + eps))
    shift = bn_beta.astype(jnp.float32) - bn_mean.astype(jnp.float32) * scale
    w1f = w1.astype(jnp.float32) * scale[None, :]

    # Lane-dense channel padding (multiples of 128).
    Cp_in = _round_up(C_in, 128)
    Cp_out = _round_up(C_out, 128)

    w1p = (jnp.zeros((Cp_in, Cp_in), jnp.float32)
           .at[:C_in, :C_in].set(w1f).astype(compute_dtype))
    shiftp = jnp.zeros((1, Cp_in), jnp.float32).at[0, :C_in].set(shift)
    w2p = (jnp.zeros((Cp_in, Cp_out), jnp.float32)
           .at[:C_in, :C_out].set(w2.astype(jnp.float32)).astype(compute_dtype))
    b2p = jnp.zeros((1, Cp_out), jnp.float32).at[0, :C_out].set(
        b2.astype(jnp.float32))

    # NCL -> token-major (M, C_in), then pad rows to a multiple of the token tile.
    M = N * L
    x_tok = jnp.transpose(x_ncl, (0, 2, 1)).reshape(M, C_in)
    tm_eff = min(tm, _round_up(M, 8))          # keep sublane-aligned, avoid huge pad
    Mp = _round_up(M, tm_eff)
    x_pad = (jnp.zeros((Mp, Cp_in), compute_dtype)
             .at[:M, :C_in].set(x_tok.astype(compute_dtype)))

    grid = (Mp // tm_eff,)

    def wspec(shape):                          # weights resident (constant index map)
        return pl.BlockSpec(shape, lambda i: (0, 0))

    in_specs = [
        pl.BlockSpec((tm_eff, Cp_in), lambda i: (i, 0)),   # x tile
        wspec((Cp_in, Cp_in)),                             # W1 (BN scale folded in)
        wspec((1, Cp_in)),                                 # BN shift
        wspec((Cp_in, Cp_out)),                            # W2
        wspec((1, Cp_out)),                                # b2
    ]
    args = [x_pad, w1p, shiftp, w2p, b2p]
    if has_proj:
        wsp = (jnp.zeros((Cp_in, Cp_out), jnp.float32)
               .at[:C_in, :C_out].set(ws.astype(jnp.float32)).astype(compute_dtype))
        in_specs.append(wspec((Cp_in, Cp_out)))            # Ws (shortcut projection)
        args.append(wsp)
        kernel = _resconv_proj_kernel
    else:
        kernel = _resconv_identity_kernel

    # VMEM budget: double-buffered x/out tiles + (double-buffered) weights,
    # kept comfortably under v7x's 64 MiB physical VMEM.
    bpe = jnp.dtype(compute_dtype).itemsize
    tile_bytes = 2 * tm_eff * (Cp_in + Cp_out) * bpe
    weight_bytes = 2 * (Cp_in * Cp_in + 2 * Cp_in * Cp_out) * bpe
    vmem_limit = int(min(max(2 * (tile_bytes + weight_bytes) + (4 << 20), 32 << 20),
                         48 << 20))

    out_pad = pl.pallas_call(
        kernel,
        out_shape=jax.ShapeDtypeStruct((Mp, Cp_out), compute_dtype),
        grid_spec=pltpu.PrefetchScalarGridSpec(
            num_scalar_prefetch=0,
            grid=grid,
            in_specs=in_specs,
            out_specs=pl.BlockSpec((tm_eff, Cp_out), lambda i: (i, 0)),
        ),
        compiler_params=pltpu.CompilerParams(
            dimension_semantics=("parallel",),
            vmem_limit_bytes=vmem_limit),
    )(*args)

    # Strip padding: (Mp, Cp_out) -> (M, C_out) -> (N, L, C_out) -> (N, C_out, L).
    out_tok = out_pad[:M, :C_out]
    return jnp.transpose(out_tok.reshape(N, L, C_out), (0, 2, 1))


def _reference(x_ncl, w1, g, b, mu, var, w2, b2, ws, eps=1e-5):
    x = jnp.transpose(x_ncl, (0, 2, 1)).astype(jnp.float32)       # (N, L, C_in)
    h = x @ w1
    h = (h - mu) / jnp.sqrt(var + eps) * g + b
    h = jnp.where(h >= 0, h, 0.01 * h)
    y1 = h @ w2 + b2
    y2 = (x @ ws) if ws is not None else x
    y = y1 + y2
    y = jnp.where(y >= 0, y, 0.01 * y)
    return jnp.transpose(y, (0, 2, 1))


if __name__ == "__main__":
    key = jax.random.PRNGKey(0)
    ks = jax.random.split(key, 12)

    # --- Case 1: projection shortcut (in_channels != out_channels) ---
    N, C_in, C_out, L = 2, 4, 8, 16
    x = jax.random.normal(ks[0], (N, C_in, L), dtype=jnp.float32)
    w1 = jax.random.normal(ks[1], (C_in, C_in), dtype=jnp.float32) * 0.5
    w2 = jax.random.normal(ks[2], (C_in, C_out), dtype=jnp.float32) * 0.5
    b2 = jax.random.normal(ks[3], (C_out,), dtype=jnp.float32) * 0.1
    ws = jax.random.normal(ks[4], (C_in, C_out), dtype=jnp.float32) * 0.5
    bn_gamma = 1.0 + 0.1 * jax.random.normal(ks[5], (C_in,), dtype=jnp.float32)
    bn_beta = 0.1 * jax.random.normal(ks[6], (C_in,), dtype=jnp.float32)
    bn_mean = 0.05 * jax.random.normal(ks[7], (C_in,), dtype=jnp.float32)
    bn_var = jnp.abs(1.0 + 0.1 * jax.random.normal(ks[7], (C_in,),
                                                   dtype=jnp.float32))

    out = jax.block_until_ready(
        res_conv1d_1x1(x, w1, bn_gamma, bn_beta, bn_mean, bn_var, w2, b2, ws))
    ref = _reference(x, w1, bn_gamma, bn_beta, bn_mean, bn_var, w2, b2, ws)
    assert out.shape == (N, C_out, L)
    assert jnp.allclose(out, ref, atol=1e-4, rtol=1e-4), "proj-shortcut mismatch"

    # --- Case 2: identity shortcut (in_channels == out_channels) ---
    Ci = 4
    x2 = jax.random.normal(ks[8], (N, Ci, L), dtype=jnp.float32)
    w1b = jax.random.normal(ks[9], (Ci, Ci), dtype=jnp.float32) * 0.5
    w2b = jax.random.normal(ks[10], (Ci, Ci), dtype=jnp.float32) * 0.5
    b2b = jax.random.normal(ks[11], (Ci,), dtype=jnp.float32) * 0.1

    out2 = jax.block_until_ready(
        res_conv1d_1x1(x2, w1b, bn_gamma, bn_beta, bn_mean, bn_var, w2b, b2b,
                       ws=None))
    ref2 = _reference(x2, w1b, bn_gamma, bn_beta, bn_mean, bn_var, w2b, b2b,
                      ws=None)
    assert out2.shape == (N, Ci, L)
    assert jnp.allclose(out2, ref2, atol=1e-4, rtol=1e-4), "identity-shortcut mismatch"

    print("KERNEL_OK")
</pallas_src>

<mosaic_0001>
module attributes {stable_mosaic.version = 11 : i64} {
  func.func @_resconv_proj_kernel(%arg0: i32, %arg1: memref<32x128xf32, #tpu.memory_space<vmem>>, %arg2: memref<128x128xf32, #tpu.memory_space<vmem>>, %arg3: memref<1x128xf32, #tpu.memory_space<vmem>>, %arg4: memref<128x128xf32, #tpu.memory_space<vmem>>, %arg5: memref<1x128xf32, #tpu.memory_space<vmem>>, %arg6: memref<128x128xf32, #tpu.memory_space<vmem>>, %arg7: memref<32x128xf32, #tpu.memory_space<vmem>>) attributes {dimension_semantics = [#tpu.dimension_semantics<parallel>], iteration_bounds = array<i64: 1>, scalar_prefetch = 0 : i64, scratch_operands = 0 : i64, tpu.core_type = #tpu.core_type<tc>, window_params = [{transform_indices = @transform_0, window_bounds = array<i64: 32, 128>}, {pipeline_mode = #tpu.pipeline_mode<synchronous>, transform_indices = @transform_1, window_bounds = array<i64: 128, 128>}, {pipeline_mode = #tpu.pipeline_mode<synchronous>, transform_indices = @transform_2, window_bounds = array<i64: 1, 128>}, {pipeline_mode = #tpu.pipeline_mode<synchronous>, transform_indices = @transform_3, window_bounds = array<i64: 128, 128>}, {pipeline_mode = #tpu.pipeline_mode<synchronous>, transform_indices = @transform_4, window_bounds = array<i64: 1, 128>}, {pipeline_mode = #tpu.pipeline_mode<synchronous>, transform_indices = @transform_5, window_bounds = array<i64: 128, 128>}, {transform_indices = @transform_6, window_bounds = array<i64: 32, 128>}]} {
    %c0 = arith.constant 0 : index
    %c0_0 = arith.constant 0 : index
    %0 = vector.load %arg1[%c0, %c0_0] : memref<32x128xf32, #tpu.memory_space<vmem>>, vector<32x128xf32>
    %c0_1 = arith.constant 0 : index
    %c0_2 = arith.constant 0 : index
    %1 = vector.load %arg2[%c0_1, %c0_2] : memref<128x128xf32, #tpu.memory_space<vmem>>, vector<128x128xf32>
    %cst = arith.constant dense<0.000000e+00> : vector<32x128xf32>
    %2 = tpu.matmul %0, %1, %cst {dimension_numbers = #tpu.dot_dimension_numbers<[1], [0], [0], [1], [0, 0, 1, 1], [], []>} : vector<32x128xf32>, vector<128x128xf32>, vector<32x128xf32> -> vector<32x128xf32>
    %c0_3 = arith.constant 0 : index
    %c0_4 = arith.constant 0 : index
    %3 = vector.load %arg3[%c0_3, %c0_4] : memref<1x128xf32, #tpu.memory_space<vmem>>, vector<1x128xf32>
    %4 = vector.broadcast %3 : vector<1x128xf32> to vector<32x128xf32>
    %5 = arith.addf %2, %4 : vector<32x128xf32>
    %cst_5 = arith.constant 0.000000e+00 : f32
    %6 = vector.broadcast %cst_5 : f32 to vector<32x128xf32>
    %7 = arith.cmpf oge, %5, %6 : vector<32x128xf32>
    %cst_6 = arith.constant 0.00999999977 : f32
    %8 = vector.broadcast %cst_6 : f32 to vector<32x128xf32>
    %9 = arith.mulf %8, %5 : vector<32x128xf32>
    %10 = arith.select %7, %5, %9 : vector<32x128xi1>, vector<32x128xf32>
    %c0_7 = arith.constant 0 : index
    %c0_8 = arith.constant 0 : index
    %11 = vector.load %arg4[%c0_7, %c0_8] : memref<128x128xf32, #tpu.memory_space<vmem>>, vector<128x128xf32>
    %cst_9 = arith.constant dense<0.000000e+00> : vector<32x128xf32>
    %12 = tpu.matmul %10, %11, %cst_9 {dimension_numbers = #tpu.dot_dimension_numbers<[1], [0], [0], [1], [0, 0, 1, 1], [], []>} : vector<32x128xf32>, vector<128x128xf32>, vector<32x128xf32> -> vector<32x128xf32>
    %c0_10 = arith.constant 0 : index
    %c0_11 = arith.constant 0 : index
    %13 = vector.load %arg5[%c0_10, %c0_11] : memref<1x128xf32, #tpu.memory_space<vmem>>, vector<1x128xf32>
    %14 = vector.broadcast %13 : vector<1x128xf32> to vector<32x128xf32>
    %15 = arith.addf %12, %14 : vector<32x128xf32>
    %c0_12 = arith.constant 0 : index
    %c0_13 = arith.constant 0 : index
    %16 = vector.load %arg6[%c0_12, %c0_13] : memref<128x128xf32, #tpu.memory_space<vmem>>, vector<128x128xf32>
    %cst_14 = arith.constant dense<0.000000e+00> : vector<32x128xf32>
    %17 = tpu.matmul %0, %16, %cst_14 {dimension_numbers = #tpu.dot_dimension_numbers<[1], [0], [0], [1], [0, 0, 1, 1], [], []>} : vector<32x128xf32>, vector<128x128xf32>, vector<32x128xf32> -> vector<32x128xf32>
    %18 = arith.addf %15, %17 : vector<32x128xf32>
    %cst_15 = arith.constant 0.000000e+00 : f32
    %19 = vector.broadcast %cst_15 : f32 to vector<32x128xf32>
    %20 = arith.cmpf oge, %18, %19 : vector<32x128xf32>
    %cst_16 = arith.constant 0.00999999977 : f32
    %21 = vector.broadcast %cst_16 : f32 to vector<32x128xf32>
    %22 = arith.mulf %21, %18 : vector<32x128xf32>
    %23 = arith.select %20, %18, %22 : vector<32x128xi1>, vector<32x128xf32>
    %c0_17 = arith.constant 0 : index
    %c0_18 = arith.constant 0 : index
    %24 = vector.load %arg7[%c0_17, %c0_18] : memref<32x128xf32, #tpu.memory_space<vmem>>, vector<32x128xf32>
    tpu.vector_store %arg7[%c0_17, %c0_18], %23 {strides = array<i32>} : memref<32x128xf32, #tpu.memory_space<vmem>>, vector<32x128xf32>,
    return
  }
  func.func @transform_0(%arg0: i32) -> (i32, i32) {
    %c0_i32 = arith.constant 0 : i32
    %c0_i32_0 = arith.constant 0 : i32
    return %arg0, %c0_i32 : i32, i32
  }
  func.func @transform_1(%arg0: i32) -> (i32, i32) {
    %c0_i32 = arith.constant 0 : i32
    %c0_i32_0 = arith.constant 0 : i32
    %c0_i32_1 = arith.constant 0 : i32
    return %c0_i32, %c0_i32_0 : i32, i32
  }
  func.func @transform_2(%arg0: i32) -> (i32, i32) {
    %c0_i32 = arith.constant 0 : i32
    %c0_i32_0 = arith.constant 0 : i32
    %c0_i32_1 = arith.constant 0 : i32
    return %c0_i32, %c0_i32_0 : i32, i32
  }
  func.func @transform_3(%arg0: i32) -> (i32, i32) {
    %c0_i32 = arith.constant 0 : i32
    %c0_i32_0 = arith.constant 0 : i32
    %c0_i32_1 = arith.constant 0 : i32
    return %c0_i32, %c0_i32_0 : i32, i32
  }
  func.func @transform_4(%arg0: i32) -> (i32, i32) {
    %c0_i32 = arith.constant 0 : i32
    %c0_i32_0 = arith.constant 0 : i32
    %c0_i32_1 = arith.constant 0 : i32
    return %c0_i32, %c0_i32_0 : i32, i32
  }
  func.func @transform_5(%arg0: i32) -> (i32, i32) {
    %c0_i32 = arith.constant 0 : i32
    %c0_i32_0 = arith.constant 0 : i32
    %c0_i32_1 = arith.constant 0 : i32
    return %c0_i32, %c0_i32_0 : i32, i32
  }
  func.func @transform_6(%arg0: i32) -> (i32, i32) {
    %c0_i32 = arith.constant 0 : i32
    %c0_i32_0 = arith.constant 0 : i32
    return %arg0, %c0_i32 : i32, i32
  }
}

</mosaic_0001>

<llo_original>
// kernel: tpu_custom_call.1
$region0: #{tpu_custom_call.1}
  #allocation0 [shape = 'u32[]', space=smem, size = 0x4, offset = 0x4, fixed_abs, tag = 'smem constant byte address 0x4 - core index']
  #allocation1 [shape = 'u32[144,128]{1,0:T(1,128)}', space=vmem, size = 0x12000, scoped, tag = 'internal scratch']
  %s0 = inlined_call_operand.hbm [shape: f32[32,128], index: 0, kind: input, shape index: {}]
  %s1 = inlined_call_operand.hbm [shape: f32[128,128], index: 1, kind: input, shape index: {}]
  %s2 = inlined_call_operand.vmem [shape: f32[1,128], index: 2, kind: input, shape index: {}]
  %s3 = inlined_call_operand.hbm [shape: f32[128,128], index: 3, kind: input, shape index: {}]
  %s4 = inlined_call_operand.vmem [shape: f32[1,128], index: 4, kind: input, shape index: {}]
  %s5 = inlined_call_operand.hbm [shape: f32[128,128], index: 5, kind: input, shape index: {}]
  %s6 = inlined_call_operand.hbm [shape: f32[32,128], index: 6, kind: output, shape index: {}]
  %s7 = sld [smem:[#allocation0]]
  $region50: #{tpu_custom_call.1} parent=0
    _
  %s9 = ssub.s32 1, %s7
  %s10 = scalar_select 0, %s9, %s7
  $region1: #{tpu_custom_call.1} parent=0
    #allocation2 [shape = 'u8[16384]{0}', space=vmem, size = 0x4000, scoped, tag = 'input window, operand 0, single buffered']
    #allocation3 [shape = 's32[1]{0}', space=sflag, size = 0x4, scoped, tag = 'scoped memory for tpu_custom_call.1']
    #allocation4 [shape = 's32[1]{0}', space=sflag, size = 0x4, scoped, tag = 'scoped memory for tpu_custom_call.1']
    #allocation5 [shape = 'u8[65536]{0}', space=vmem, size = 0x10000, scoped, tag = 'input window, operand 1, single buffered']
    #allocation6 [shape = 's32[1]{0}', space=sflag, size = 0x4, scoped, tag = 'scoped memory for tpu_custom_call.1']
    #allocation7 [shape = 'u8[65536]{0}', space=vmem, size = 0x10000, scoped, tag = 'input window, operand 3, single buffered']
    #allocation8 [shape = 'u8[65536]{0}', space=vmem, size = 0x10000, scoped, tag = 'input window, operand 5, single buffered']
    #allocation9 [shape = 's32[1]{0}', space=sflag, size = 0x4, scoped, tag = 'scoped memory for tpu_custom_call.1']
    #allocation10 [shape = 'u8[16384]{0}', space=vmem, size = 0x4000, scoped, tag = 'output window, operand 0, single buffered']
    %11 = vsyncpa [#allocation3], 0
    %12 = vsyncpa [#allocation6], 0
    %13 = vsyncpa [#allocation9], 0
    %14 = vsyncpa [#allocation4], 0
    // Predicated region
    $region2: #{tpu_custom_call.1} parent=1 // pred_check
      _
    $region3: #{tpu_custom_call.1} parent=1 // pred_check_branch
      %16 = sbr.rel (0) target = $region5
    $region4: #{tpu_custom_call.1} parent=1 // pred_region
      %s18 = ssub.s32 512, 512
      %19 = vsyncadd [#allocation3], %s18
      %s20 = sshll.u32 [#allocation2], 4
      %s21 = int_to_ptr.vmem [resolvable:$true] %s20
      %26 = dma.hbm_to_vmem [thread:$0]  %s0, 512, %s21, [#allocation3], 128, 128, 8
    $region5: #{tpu_custom_call.1} parent=1 // pred_fallthru
      _
    // Predicated region
    $region6: #{tpu_custom_call.1} parent=1 // pred_check
      _
    $region7: #{tpu_custom_call.1} parent=1 // pred_check_branch
      %28 = sbr.rel (0) target = $region9
    $region8: #{tpu_custom_call.1} parent=1 // pred_region
      %s30 = ssub.s32 2048, 2048
      %31 = vsyncadd [#allocation6], %s30
      %s32 = sshll.u32 [#allocation5], 4
      %s33 = int_to_ptr.vmem [resolvable:$true] %s32
      %38 = dma.hbm_to_vmem [thread:$0]  %s1, 2048, %s33, [#allocation6], 128, 128, 8
    $region9: #{tpu_custom_call.1} parent=1 // pred_fallthru
      _
    // Predicated region
    $region10: #{tpu_custom_call.1} parent=1 // pred_check
      _
    $region11: #{tpu_custom_call.1} parent=1 // pred_check_branch
      %40 = sbr.rel (0) target = $region13
    $region12: #{tpu_custom_call.1} parent=1 // pred_region
      _
    $region13: #{tpu_custom_call.1} parent=1 // pred_fallthru
      _
    // Predicated region
    $region14: #{tpu_custom_call.1} parent=1 // pred_check
      _
    $region15: #{tpu_custom_call.1} parent=1 // pred_check_branch
      %42 = sbr.rel (0) target = $region17
    $region16: #{tpu_custom_call.1} parent=1 // pred_region
      %s44 = ssub.s32 2048, 2048
      %45 = vsyncadd [#allocation6], %s44
      %s46 = sshll.u32 [#allocation7], 4
      %s47 = int_to_ptr.vmem [resolvable:$true] %s46
      %52 = dma.hbm_to_vmem [thread:$0]  %s3, 2048, %s47, [#allocation6], 128, 128, 8
    $region17: #{tpu_custom_call.1} parent=1 // pred_fallthru
      _
    // Predicated region
    $region18: #{tpu_custom_call.1} parent=1 // pred_check
      _
    $region19: #{tpu_custom_call.1} parent=1 // pred_check_branch
      %54 = sbr.rel (0) target = $region21
    $region20: #{tpu_custom_call.1} parent=1 // pred_region
      _
    $region21: #{tpu_custom_call.1} parent=1 // pred_fallthru
      _
    // Predicated region
    $region22: #{tpu_custom_call.1} parent=1 // pred_check
      _
    $region23: #{tpu_custom_call.1} parent=1 // pred_check_branch
      %56 = sbr.rel (0) target = $region25
    $region24: #{tpu_custom_call.1} parent=1 // pred_region
      %s58 = ssub.s32 2048, 2048
      %59 = vsyncadd [#allocation9], %s58
      %s60 = sshll.u32 [#allocation8], 4
      %s61 = int_to_ptr.vmem [resolvable:$true] %s60
      %66 = dma.hbm_to_vmem [thread:$0]  %s5, 2048, %s61, [#allocation9], 128, 128, 8
    $region25: #{tpu_custom_call.1} parent=1 // pred_fallthru
      _
    // Predicated region
    $region26: #{tpu_custom_call.1} parent=1 // pred_check
      _
    $region27: #{tpu_custom_call.1} parent=1 // pred_check_branch
      %68 = sbr.rel (0) target = $region29
    $region28: #{tpu_custom_call.1} parent=1 // pred_region
      %69 = dma.done [#allocation3], 512
    $region29: #{tpu_custom_call.1} parent=1 // pred_fallthru
      _
    // Predicated region
    $region30: #{tpu_custom_call.1} parent=1 // pred_check
      _
    $region31: #{tpu_custom_call.1} parent=1 // pred_check_branch
      %71 = sbr.rel (0) target = $region33
    $region32: #{tpu_custom_call.1} parent=1 // pred_region
      %72 = dma.done [#allocation6], 2048
    $region33: #{tpu_custom_call.1} parent=1 // pred_fallthru
      _
    // Predicated region
    $region34: #{tpu_custom_call.1} parent=1 // pred_check
      _
    $region35: #{tpu_custom_call.1} parent=1 // pred_check_branch
      %74 = sbr.rel (0) target = $region37
    $region36: #{tpu_custom_call.1} parent=1 // pred_region
      %75 = dma.done [#allocation6], 2048
    $region37: #{tpu_custom_call.1} parent=1 // pred_fallthru
      _
    // Predicated region
    $region38: #{tpu_custom_call.1} parent=1 // pred_check
      _
    $region39: #{tpu_custom_call.1} parent=1 // pred_check_branch
      %77 = sbr.rel (0) target = $region41
    $region40: #{tpu_custom_call.1} parent=1 // pred_region
      %78 = dma.done [#allocation9], 2048
    $region41: #{tpu_custom_call.1} parent=1 // pred_fallthru
      _
    %v79 = vld [vmem:[#allocation2] sm:$0xff]
    %v80 = vld [vmem:[#allocation2 + $0x8] sm:$0xff]
    %v81 = vld [vmem:[#allocation2 + $0x10] sm:$0xff]
    %v82 = vld [vmem:[#allocation2 + $0x18] sm:$0xff]
    %v83 = vld [vmem:[#allocation5] sm:$0xff]
    %v84 = vld [vmem:[#allocation5 + $0x8] sm:$0xff]
    %v85 = vld [vmem:[#allocation5 + $0x10] sm:$0xff]
    %v86 = vld [vmem:[#allocation5 + $0x18] sm:$0xff]
    %v87 = vld [vmem:[#allocation5 + $0x20] sm:$0xff]
    %v88 = vld [vmem:[#allocation5 + $0x28] sm:$0xff]
    %v89 = vld [vmem:[#allocation5 + $0x30] sm:$0xff]
    %v90 = vld [vmem:[#allocation5 + $0x38] sm:$0xff]
    %v91 = vld [vmem:[#allocation5 + $0x40] sm:$0xff]
    %v92 = vld [vmem:[#allocation5 + $0x48] sm:$0xff]
    %v93 = vld [vmem:[#allocation5 + $0x50] sm:$0xff]
    %v94 = vld [vmem:[#allocation5 + $0x58] sm:$0xff]
    %v95 = vld [vmem:[#allocation5 + $0x60] sm:$0xff]
    %v96 = vld [vmem:[#allocation5 + $0x68] sm:$0xff]
    %v97 = vld [vmem:[#allocation5 + $0x70] sm:$0xff]
    %v98 = vld [vmem:[#allocation5 + $0x78] sm:$0xff]
    %v99 = vld [vmem:[%s2] sm:$0x1]
    %v101 = vlaneseq
    %v102 = vshrl.u32 %v101, 7
    %v103 = vsub.s32 0, %v102
    %v104 = vrot.slane %v99, %v103
    %106 = vmatprep.subr.mxu0 0.0
    %107 = vmatpush1.msra.mxu0 %v98
    %108 = vmatprep.subr.mxu0 0.0
    %109 = vmatpush1.msra.mxu0 %v97
    %110 = vmatprep.subr.mxu0 0.0
    %111 = vmatpush1.msra.mxu0 %v96
    %112 = vmatprep.subr.mxu0 0.0
    %113 = vmatpush1.msra.mxu0 %v95
    %114 = vmatprep.subr.mxu0 0.0
    %115 = vmatpush1.msra.mxu0 %v94
    %116 = vmatprep.subr.mxu0 0.0
    %117 = vmatpush1.msra.mxu0 %v93
    %118 = vmatprep.subr.mxu0 0.0
    %119 = vmatpush1.msra.mxu0 %v92
    %120 = vmatprep.subr.mxu0 0.0
    %121 = vmatpush1.msra.mxu0 %v91
    %122 = vmatprep.subr.mxu0 0.0
    %123 = vmatpush1.msra.mxu0 %v90
    %124 = vmatprep.subr.mxu0 0.0
    %125 = vmatpush1.msra.mxu0 %v89
    %126 = vmatprep.subr.mxu0 0.0
    %127 = vmatpush1.msra.mxu0 %v88
    %128 = vmatprep.subr.mxu0 0.0
    %129 = vmatpush1.msra.mxu0 %v87
    %130 = vmatprep.subr.mxu0 0.0
    %131 = vmatpush1.msra.mxu0 %v86
    %132 = vmatprep.subr.mxu0 0.0
    %133 = vmatpush1.msra.mxu0 %v85
    %134 = vmatprep.subr.mxu0 0.0
    %135 = vmatpush1.msra.mxu0 %v84
    %136 = vmatprep.subr.mxu0 0.0
    %137 = vmatpush1.msra.mxu0 %v83
    %138 = vmatprep.subr.mxu0 0.0
    %139 = vmatpush2.msra.mxu0 0.0
    %140 = vmatprep.subr.mxu0 0.0
    %141 = vmatpush2.msra.mxu0 0.0
    %142 = vmatprep.subr.mxu0 0.0
    %143 = vmatpush2.msra.mxu0 0.0
    %144 = vmatprep.subr.mxu0 0.0
    %145 = vmatpush2.msra.mxu0 0.0
    %146 = vmatprep.subr.mxu0 0.0
    %147 = vmatpush2.msra.mxu0 0.0
    %148 = vmatprep.subr.mxu0 0.0
    %149 = vmatpush2.msra.mxu0 0.0
    %150 = vmatprep.subr.mxu0 0.0
    %151 = vmatpush2.msra.mxu0 0.0
    %152 = vmatprep.subr.mxu0 0.0
    %153 = vmatpush2.msra.mxu0 0.0
    %154 = vmatprep.subr.mxu0 0.0
    %155 = vmatpush2.msra.mxu0 0.0
    %156 = vmatprep.subr.mxu0 0.0
    %157 = vmatpush2.msra.mxu0 0.0
    %158 = vmatprep.subr.mxu0 0.0
    %159 = vmatpush2.msra.mxu0 0.0
    %160 = vmatprep.subr.mxu0 0.0
    %161 = vmatpush2.msra.mxu0 0.0
    %162 = vmatprep.subr.mxu0 0.0
    %163 = vmatpush2.msra.mxu0 0.0
    %164 = vmatprep.subr.mxu0 0.0
    %165 = vmatpush2.msra.mxu0 0.0
    %166 = vmatprep.subr.mxu0 0.0
    %167 = vmatpush2.msra.mxu0 0.0
    %168 = vmatprep.subr.mxu0 0.0
    %169 = vmatpush2.msra.mxu0 0.0
    %170 = vmatprep.mubr.f32.mxu0 0.0
    %171 = vmatmul.mubr.f32.gmra.mxu0 %v79
    %v172 = vpop.f32.mrf.mxu0
    %v173 = vadd.f32 %v104, %v172
    %v174 = vpop.f32.mrf.mxu0
    %175 = vmatprep.mubr.f32.mxu0 0.0
    %176 = vmatmul.mubr.f32.gmra.mxu0 %v80
    %v177 = vpop.f32.mrf.mxu0
    %v178 = vadd.f32 %v104, %v177
    %v179 = vpop.f32.mrf.mxu0
    %180 = vmatprep.mubr.f32.mxu0 0.0
    %181 = vmatmul.mubr.f32.gmra.mxu0 %v81
    %v182 = vpop.f32.mrf.mxu0
    %v183 = vadd.f32 %v104, %v182
    %v184 = vpop.f32.mrf.mxu0
    %185 = vmatprep.mubr.f32.mxu0 0.0
    %186 = vmatmul.mubr.f32.gmra.mxu0 %v82
    %v187 = vpop.f32.mrf.mxu0
    %v188 = vadd.f32 %v104, %v187
    %v189 = vpop.f32.mrf.mxu0
    %190 = vdwg.mxu0
    %vm191 = vcmp.ge.f32.partialorder %v173, 0.0
    %vm192 = vcmp.ge.f32.partialorder %v178, 0.0
    %vm193 = vcmp.ge.f32.partialorder %v183, 0.0
    %vm194 = vcmp.ge.f32.partialorder %v188, 0.0
    %v195 = vmul.f32 %v173, 0.01
    %v196 = vmul.f32 %v178, 0.01
    %v197 = vmul.f32 %v183, 0.01
    %v198 = vmul.f32 %v188, 0.01
    %v199 = vsel %vm191, %v173, %v195
    %v200 = vsel %vm192, %v178, %v196
    %v201 = vsel %vm193, %v183, %v197
    %v202 = vsel %vm194, %v188, %v198
    %v203 = vld [vmem:[#allocation7] sm:$0xff]
    %v204 = vld [vmem:[#allocation7 + $0x8] sm:$0xff]
    %v205 = vld [vmem:[#allocation7 + $0x10] sm:$0xff]
    %v206 = vld [vmem:[#allocation7 + $0x18] sm:$0xff]
    %v207 = vld [vmem:[#allocation7 + $0x20] sm:$0xff]
    %v208 = vld [vmem:[#allocation7 + $0x28] sm:$0xff]
    %v209 = vld [vmem:[#allocation7 + $0x30] sm:$0xff]
    %v210 = vld [vmem:[#allocation7 + $0x38] sm:$0xff]
    %v211 = vld [vmem:[#allocation7 + $0x40] sm:$0xff]
    %v212 = vld [vmem:[#allocation7 + $0x48] sm:$0xff]
    %v213 = vld [vmem:[#allocation7 + $0x50] sm:$0xff]
    %v214 = vld [vmem:[#allocation7 + $0x58] sm:$0xff]
    %v215 = vld [vmem:[#allocation7 + $0x60] sm:$0xff]
    %v216 = vld [vmem:[#allocation7 + $0x68] sm:$0xff]
    %v217 = vld [vmem:[#allocation7 + $0x70] sm:$0xff]
    %v218 = vld [vmem:[#allocation7 + $0x78] sm:$0xff]
    %v219 = vld [vmem:[%s4] sm:$0x1]
    %v221 = vlaneseq
    %v222 = vshrl.u32 %v221, 7
    %v223 = vsub.s32 0, %v222
    %v224 = vrot.slane %v219, %v223
    %226 = vmatprep.subr.mxu0 0.0
    %227 = vmatpush1.msra.mxu0 %v218
    %228 = vmatprep.subr.mxu0 0.0
    %229 = vmatpush1.msra.mxu0 %v217
    %230 = vmatprep.subr.mxu0 0.0
    %231 = vmatpush1.msra.mxu0 %v216
    %232 = vmatprep.subr.mxu0 0.0
    %233 = vmatpush1.msra.mxu0 %v215
    %234 = vmatprep.subr.mxu0 0.0
    %235 = vmatpush1.msra.mxu0 %v214
    %236 = vmatprep.subr.mxu0 0.0
    %237 = vmatpush1.msra.mxu0 %v213
    %238 = vmatprep.subr.mxu0 0.0
    %239 = vmatpush1.msra.mxu0 %v212
    %240 = vmatprep.subr.mxu0 0.0
    %241 = vmatpush1.msra.mxu0 %v211
    %242 = vmatprep.subr.mxu0 0.0
    %243 = vmatpush1.msra.mxu0 %v210
    %244 = vmatprep.subr.mxu0 0.0
    %245 = vmatpush1.msra.mxu0 %v209
    %246 = vmatprep.subr.mxu0 0.0
    %247 = vmatpush1.msra.mxu0 %v208
    %248 = vmatprep.subr.mxu0 0.0
    %249 = vmatpush1.msra.mxu0 %v207
    %250 = vmatprep.subr.mxu0 0.0
    %251 = vmatpush1.msra.mxu0 %v206
    %252 = vmatprep.subr.mxu0 0.0
    %253 = vmatpush1.msra.mxu0 %v205
    %254 = vmatprep.subr.mxu0 0.0
    %255 = vmatpush1.msra.mxu0 %v204
    %256 = vmatprep.subr.mxu0 0.0
    %257 = vmatpush1.msra.mxu0 %v203
    %258 = vmatprep.subr.mxu0 0.0
    %259 = vmatpush2.msra.mxu0 0.0
    %260 = vmatprep.subr.mxu0 0.0
    %261 = vmatpush2.msra.mxu0 0.0
    %262 = vmatprep.subr.mxu0 0.0
    %263 = vmatpush2.msra.mxu0 0.0
    %264 = vmatprep.subr.mxu0 0.0
    %265 = vmatpush2.msra.mxu0 0.0
    %266 = vmatprep.subr.mxu0 0.0
    %267 = vmatpush2.msra.mxu0 0.0
    %268 = vmatprep.subr.mxu0 0.0
    %269 = vmatpush2.msra.mxu0 0.0
    %270 = vmatprep.subr.mxu0 0.0
    %271 = vmatpush2.msra.mxu0 0.0
    %272 = vmatprep.subr.mxu0 0.0
    %273 = vmatpush2.msra.mxu0 0.0
    %274 = vmatprep.subr.mxu0 0.0
    %275 = vmatpush2.msra.mxu0 0.0
    %276 = vmatprep.subr.mxu0 0.0
    %277 = vmatpush2.msra.mxu0 0.0
    %278 = vmatprep.subr.mxu0 0.0
    %279 = vmatpush2.msra.mxu0 0.0
    %280 = vmatprep.subr.mxu0 0.0
    %281 = vmatpush2.msra.mxu0 0.0
    %282 = vmatprep.subr.mxu0 0.0
    %283 = vmatpush2.msra.mxu0 0.0
    %284 = vmatprep.subr.mxu0 0.0
    %285 = vmatpush2.msra.mxu0 0.0
    %286 = vmatprep.subr.mxu0 0.0
    %287 = vmatpush2.msra.mxu0 0.0
    %288 = vmatprep.subr.mxu0 0.0
    %289 = vmatpush2.msra.mxu0 0.0
    %290 = vmatprep.mubr.f32.mxu0 0.0
    %291 = vmatmul.mubr.f32.gmra.mxu0 %v199
    %v292 = vpop.f32.mrf.mxu0
    %v293 = vadd.f32 %v224, %v292
    %v294 = vpop.f32.mrf.mxu0
    %295 = vmatprep.mubr.f32.mxu0 0.0
    %296 = vmatmul.mubr.f32.gmra.mxu0 %v200
    %v297 = vpop.f32.mrf.mxu0
    %v298 = vadd.f32 %v224, %v297
    %v299 = vpop.f32.mrf.mxu0
    %300 = vmatprep.mubr.f32.mxu0 0.0
    %301 = vmatmul.mubr.f32.gmra.mxu0 %v201
    %v302 = vpop.f32.mrf.mxu0
    %v303 = vadd.f32 %v224, %v302
    %v304 = vpop.f32.mrf.mxu0
    %305 = vmatprep.mubr.f32.mxu0 0.0
    %306 = vmatmul.mubr.f32.gmra.mxu0 %v202
    %v307 = vpop.f32.mrf.mxu0
    %v308 = vadd.f32 %v224, %v307
    %v309 = vpop.f32.mrf.mxu0
    %310 = vdwg.mxu0
    %v311 = vld [vmem:[#allocation8] sm:$0xff]
    %v312 = vld [vmem:[#allocation8 + $0x8] sm:$0xff]
    %v313 = vld [vmem:[#allocation8 + $0x10] sm:$0xff]
    %v314 = vld [vmem:[#allocation8 + $0x18] sm:$0xff]
    %v315 = vld [vmem:[#allocation8 + $0x20] sm:$0xff]
    %v316 = vld [vmem:[#allocation8 + $0x28] sm:$0xff]
    %v317 = vld [vmem:[#allocation8 + $0x30] sm:$0xff]
    %v318 = vld [vmem:[#allocation8 + $0x38] sm:$0xff]
    %v319 = vld [vmem:[#allocation8 + $0x40] sm:$0xff]
    %v320 = vld [vmem:[#allocation8 + $0x48] sm:$0xff]
    %v321 = vld [vmem:[#allocation8 + $0x50] sm:$0xff]
    %v322 = vld [vmem:[#allocation8 + $0x58] sm:$0xff]
    %v323 = vld [vmem:[#allocation8 + $0x60] sm:$0xff]
    %v324 = vld [vmem:[#allocation8 + $0x68] sm:$0xff]
    %v325 = vld [vmem:[#allocation8 + $0x70] sm:$0xff]
    %v326 = vld [vmem:[#allocation8 + $0x78] sm:$0xff]
    %327 = vmatprep.subr.mxu0 0.0
    %328 = vmatpush1.msra.mxu0 %v326
    %329 = vmatprep.subr.mxu0 0.0
    %330 = vmatpush1.msra.mxu0 %v325
    %331 = vmatprep.subr.mxu0 0.0
    %332 = vmatpush1.msra.mxu0 %v324
    %333 = vmatprep.subr.mxu0 0.0
    %334 = vmatpush1.msra.mxu0 %v323
    %335 = vmatprep.subr.mxu0 0.0
    %336 = vmatpush1.msra.mxu0 %v322
    %337 = vmatprep.subr.mxu0 0.0
    %338 = vmatpush1.msra.mxu0 %v321
    %339 = vmatprep.subr.mxu0 0.0
    %340 = vmatpush1.msra.mxu0 %v320
    %341 = vmatprep.subr.mxu0 0.0
    %342 = vmatpush1.msra.mxu0 %v319
    %343 = vmatprep.subr.mxu0 0.0
    %344 = vmatpush1.msra.mxu0 %v318
    %345 = vmatprep.subr.mxu0 0.0
    %346 = vmatpush1.msra.mxu0 %v317
    %347 = vmatprep.subr.mxu0 0.0
    %348 = vmatpush1.msra.mxu0 %v316
    %349 = vmatprep.subr.mxu0 0.0
    %350 = vmatpush1.msra.mxu0 %v315
    %351 = vmatprep.subr.mxu0 0.0
    %352 = vmatpush1.msra.mxu0 %v314
    %353 = vmatprep.subr.mxu0 0.0
    %354 = vmatpush1.msra.mxu0 %v313
    %355 = vmatprep.subr.mxu0 0.0
    %356 = vmatpush1.msra.mxu0 %v312
    %357 = vmatprep.subr.mxu0 0.0
    %358 = vmatpush1.msra.mxu0 %v311
    %359 = vmatprep.subr.mxu0 0.0
    %360 = vmatpush2.msra.mxu0 0.0
    %361 = vmatprep.subr.mxu0 0.0
    %362 = vmatpush2.msra.mxu0 0.0
    %363 = vmatprep.subr.mxu0 0.0
    %364 = vmatpush2.msra.mxu0 0.0
    %365 = vmatprep.subr.mxu0 0.0
    %366 = vmatpush2.msra.mxu0 0.0
    %367 = vmatprep.subr.mxu0 0.0
    %368 = vmatpush2.msra.mxu0 0.0
    %369 = vmatprep.subr.mxu0 0.0
    %370 = vmatpush2.msra.mxu0 0.0
    %371 = vmatprep.subr.mxu0 0.0
    %372 = vmatpush2.msra.mxu0 0.0
    %373 = vmatprep.subr.mxu0 0.0
    %374 = vmatpush2.msra.mxu0 0.0
    %375 = vmatprep.subr.mxu0 0.0
    %376 = vmatpush2.msra.mxu0 0.0
    %377 = vmatprep.subr.mxu0 0.0
    %378 = vmatpush2.msra.mxu0 0.0
    %379 = vmatprep.subr.mxu0 0.0
    %380 = vmatpush2.msra.mxu0 0.0
    %381 = vmatprep.subr.mxu0 0.0
    %382 = vmatpush2.msra.mxu0 0.0
    %383 = vmatprep.subr.mxu0 0.0
    %384 = vmatpush2.msra.mxu0 0.0
    %385 = vmatprep.subr.mxu0 0.0
    %386 = vmatpush2.msra.mxu0 0.0
    %387 = vmatprep.subr.mxu0 0.0
    %388 = vmatpush2.msra.mxu0 0.0
    %389 = vmatprep.subr.mxu0 0.0
    %390 = vmatpush2.msra.mxu0 0.0
    %391 = vmatprep.mubr.f32.mxu0 0.0
    %392 = vmatmul.mubr.f32.gmra.mxu0 %v79
    %v393 = vpop.f32.mrf.mxu0
    %v394 = vadd.f32 0.0, %v393
    %v395 = vpop.f32.mrf.mxu0
    %396 = vmatprep.mubr.f32.mxu0 0.0
    %397 = vmatmul.mubr.f32.gmra.mxu0 %v80
    %v398 = vpop.f32.mrf.mxu0
    %v399 = vadd.f32 0.0, %v398
    %v400 = vpop.f32.mrf.mxu0
    %401 = vmatprep.mubr.f32.mxu0 0.0
    %402 = vmatmul.mubr.f32.gmra.mxu0 %v81
    %v403 = vpop.f32.mrf.mxu0
    %v404 = vadd.f32 0.0, %v403
    %v405 = vpop.f32.mrf.mxu0
    %406 = vmatprep.mubr.f32.mxu0 0.0
    %407 = vmatmul.mubr.f32.gmra.mxu0 %v82
    %v408 = vpop.f32.mrf.mxu0
    %v409 = vadd.f32 0.0, %v408
    %v410 = vpop.f32.mrf.mxu0
    %411 = vdwg.mxu0
    %v412 = vadd.f32 %v293, %v394
    %v413 = vadd.f32 %v298, %v399
    %v414 = vadd.f32 %v303, %v404
    %v415 = vadd.f32 %v308, %v409
    %vm416 = vcmp.ge.f32.partialorder %v412, 0.0
    %vm417 = vcmp.ge.f32.partialorder %v413, 0.0
    %vm418 = vcmp.ge.f32.partialorder %v414, 0.0
    %vm419 = vcmp.ge.f32.partialorder %v415, 0.0
    %v420 = vmul.f32 %v412, 0.01
    %v421 = vmul.f32 %v413, 0.01
    %v422 = vmul.f32 %v414, 0.01
    %v423 = vmul.f32 %v415, 0.01
    %v424 = vsel %vm416, %v412, %v420
    %v425 = vsel %vm417, %v413, %v421
    %v426 = vsel %vm418, %v414, %v422
    %v427 = vsel %vm419, %v415, %v423
    %428 = vst [vmem:[#allocation10] sm:$0xff] %v424
    %429 = vst [vmem:[#allocation10 + $0x8] sm:$0xff] %v425
    %430 = vst [vmem:[#allocation10 + $0x10] sm:$0xff] %v426
    %431 = vst [vmem:[#allocation10 + $0x18] sm:$0xff] %v427
    // Predicated region
    $region42: #{tpu_custom_call.1} parent=1 // pred_check
      _
    $region43: #{tpu_custom_call.1} parent=1 // pred_check_branch
      %433 = sbr.rel (0) target = $region45
    $region44: #{tpu_custom_call.1} parent=1 // pred_region
      %s435 = ssub.s32 512, 512
      %436 = vsyncadd [#allocation4], %s435
      %s437 = sshll.u32 [#allocation10], 4
      %s438 = int_to_ptr.vmem [resolvable:$true] %s437
      %443 = dma.vmem_to_hbm [thread:$0]  %s438, 512, %s6, [#allocation4], 128, 128, 8
    $region45: #{tpu_custom_call.1} parent=1 // pred_fallthru
      _
    // Predicated region
    $region46: #{tpu_custom_call.1} parent=1 // pred_check
      _
    $region47: #{tpu_custom_call.1} parent=1 // pred_check_branch
      %445 = sbr.rel (0) target = $region49
    $region48: #{tpu_custom_call.1} parent=1 // pred_region
      %446 = dma.done [#allocation4], 512
    $region49: #{tpu_custom_call.1} parent=1 // pred_fallthru
      _
    %447 = vsyncpa [#allocation3], 1
    %448 = vsyncpa [#allocation6], 1
    %449 = vsyncpa [#allocation9], 1
    %450 = vsyncpa [#allocation4], 1

</llo_original>
